<compile_context>
chip_gen: v7x
topology: tpu7x:2x2x1
jax: 0.10.0
libtpu: 0.0.40
codegen_flags: <defaults>
</compile_context>

<pallas_src>
import functools
import math

import jax
import jax.numpy as jnp
from jax.experimental import pallas as pl
from jax.experimental.pallas import tpu as pltpu


def _round_up(n, m):
    return ((n + m - 1) // m) * m


def _vae_kernel(xin_ref, wa_ref, wb_ref, wc_ref, b_ref, out_ref,
                *, a_dim, l_dim, a_pad, head_w):
    """Fused VAE forward for one (block_b, in_w) packed batch tile.

    Input slab  (f32): [ x(A) | eps(L) | 0-pad ]                 width in_w  (mult of 128)
    Weight slabs (bf16, 128-aligned lane offsets, zero padding):
      wa: [ enc.fc1 (in_w,256) rows>=A zero | dec.fc1 (L,128) ]   shape (in_w, 384)
      wb: [ fused mu|logvar head (128,head_w) cols>=2L zero | dec.fc2 (128,256) ]
      wc: [ enc.fc3 (256,128) | dec.fc3 (256,a_pad) cols>=A zero ]
    Bias slab (f32, zero-padded rows):
      row0 eb1(256) row1 eb2(128) row2 head(head_w) row3 db1(128) row4 db2(256) row5 db3(a_pad)
    Output slab (f32): [ recon (a_pad) | mu|logvar (head_w) ]     width out_w = a_pad+head_w
    """
    f32, bf16 = jnp.float32, jnp.bfloat16
    A, L = a_dim, l_dim

    xin = xin_ref[...]                                        # (bb, in_w) f32

    # ---- Encoder fc1 + LeakyReLU(0.2) ----
    # K widened to in_w: weight rows >= A are zero, so eps / pad lanes drop out exactly.
    h = jnp.dot(xin.astype(bf16), wa_ref[:, 0:256],
                preferred_element_type=f32) + b_ref[0:1, 0:256]
    h = jnp.maximum(h, 0.2 * h)

    # ---- Encoder fc3 + LeakyReLU(0.2) ----
    h = jnp.dot(h.astype(bf16), wc_ref[:, 0:128],
                preferred_element_type=f32) + b_ref[1:2, 0:128]
    h = jnp.maximum(h, 0.2 * h)

    # ---- Fused mu | logvar head: one lane-aligned N=head_w matmul ----
    ml = jnp.dot(h.astype(bf16), wb_ref[:, 0:head_w],
                 preferred_element_type=f32) + b_ref[2:3, 0:head_w]
    mu = ml[:, 0:L]
    logvar = ml[:, L:2 * L]

    # ---- Reparameterize (f32): z = mu + eps * exp(0.5 * logvar) ----
    eps = xin[:, A:A + L]
    z = mu + eps * jnp.exp(0.5 * logvar)

    # ---- Decoder fc1 + ReLU ----
    d = jnp.dot(z.astype(bf16), wa_ref[0:L, 256:384],
                preferred_element_type=f32) + b_ref[3:4, 0:128]
    d = jnp.maximum(d, 0.0)

    # ---- Decoder fc2 + ReLU ----
    d = jnp.dot(d.astype(bf16), wb_ref[:, head_w:head_w + 256],
                preferred_element_type=f32) + b_ref[4:5, 0:256]
    d = jnp.maximum(d, 0.0)

    # ---- Decoder fc3 + tanh (lane-aligned N=a_pad; pad cols -> tanh(0)=0) ----
    recon = jnp.tanh(
        jnp.dot(d.astype(bf16), wc_ref[:, 128:128 + a_pad],
                preferred_element_type=f32) + b_ref[5:6, 0:a_pad])

    # ---- Two full-width, 128-aligned unmasked stores cover the whole output block ----
    out_ref[:, 0:a_pad] = recon
    out_ref[:, a_pad:a_pad + head_w] = ml                     # mu | logvar | 0-pad


def vae_forward(x, eps, packed):
    """x: (B, airfoil_dim) f32, eps: (B, latent_dim) f32. Returns (recon, mu, logvar)."""
    B, A = x.shape
    L = eps.shape[1]
    wa, wb, wc, bias = packed
    head_w = wb.shape[1] - 256
    a_pad = wc.shape[1] - 128
    in_w = _round_up(A + L, 128)
    out_w = a_pad + head_w

    # Batch tiling:
    #   tiny batches      -> single tile (grid degenerates to one step)
    #   mid-size batches  -> 2 tiles so the "parallel" axis can shard across v7x's 2 TCs
    #   large batches     -> 256-row tiles (amortize MXU fill/drain + per-step overhead)
    if B <= 16:
        bb = _round_up(B, 8)
    elif B <= 512:
        bb = _round_up((B + 1) // 2, 8)
    else:
        bb = 256
    Bp = _round_up(B, bb)

    # One lane-dense packed input slab: [x(A) | eps(L) | 0-pad] -> single 128-wide DMA/tile.
    xin = jnp.zeros((Bp, in_w), jnp.float32)
    xin = xin.at[:B, 0:A].set(x).at[:B, A:A + L].set(eps)

    kernel = functools.partial(_vae_kernel, a_dim=A, l_dim=L,
                               a_pad=a_pad, head_w=head_w)

    grid_spec = pltpu.PrefetchScalarGridSpec(
        num_scalar_prefetch=0,
        grid=(Bp // bb,),
        in_specs=[
            pl.BlockSpec((bb, in_w), lambda i: (i, 0)),     # packed x|eps batch tile
            pl.BlockSpec(wa.shape, lambda i: (0, 0)),       # weight slabs: constant
            pl.BlockSpec(wb.shape, lambda i: (0, 0)),       #   index_map -> stay
            pl.BlockSpec(wc.shape, lambda i: (0, 0)),       #   VMEM-resident
            pl.BlockSpec(bias.shape, lambda i: (0, 0)),     # packed bias slab
        ],
        out_specs=pl.BlockSpec((bb, out_w), lambda i: (i, 0)),
    )

    out = pl.pallas_call(
        kernel,
        out_shape=jax.ShapeDtypeStruct((Bp, out_w), jnp.float32),
        grid_spec=grid_spec,
        compiler_params=pltpu.CompilerParams(
            dimension_semantics=("parallel",)),
    )(xin, wa, wb, wc, bias)

    recon = out[:B, 0:A]
    mu = out[:B, a_pad:a_pad + L]
    logvar = out[:B, a_pad + L:a_pad + 2 * L]
    return recon, mu, logvar


def _init_linear(key, in_dim, out_dim):
    """PyTorch nn.Linear default init; weight returned already transposed to (in, out)."""
    kw, kb = jax.random.split(key)
    bound = 1.0 / math.sqrt(in_dim)
    w = jax.random.uniform(kw, (in_dim, out_dim), jnp.float32, -bound, bound)
    b = jax.random.uniform(kb, (out_dim,), jnp.float32, -bound, bound)
    return w, b


def init_vae_params(key, airfoil_dim, latent_dim):
    keys = jax.random.split(key, 7)
    ew1, eb1 = _init_linear(keys[0], airfoil_dim, 256)       # Encoder.fc1
    ew2, eb2 = _init_linear(keys[1], 256, 128)               # Encoder.fc3
    ewmu, ebmu = _init_linear(keys[2], 128, latent_dim)      # Encoder.fc5_mu
    ewlv, eblv = _init_linear(keys[3], 128, latent_dim)      # Encoder.fc5_logvar
    dw1, db1 = _init_linear(keys[4], latent_dim, 128)        # Decoder.fc1
    dw2, db2 = _init_linear(keys[5], 128, 256)               # Decoder.fc2
    dw3, db3 = _init_linear(keys[6], 256, airfoil_dim)       # Decoder.fc3
    return (ew1, eb1, ew2, eb2, ewmu, ebmu, ewlv, eblv,
            dw1, db1, dw2, db2, dw3, db3)


def pack_vae_params(params, airfoil_dim, latent_dim):
    """Pack 14 tensors into 3 bf16 weight slabs + 1 f32 bias slab (lane-aligned).

    Zero padding is a correctness invariant: widened N (head -> head_w, dec.fc3 -> a_pad)
    and widened K (enc.fc1 -> in_w) dots rely on the padded weight/bias entries being
    exactly zero so pad lanes come out 0 / tanh(0)=0 and eps lanes drop out of fc1.
    """
    (ew1, eb1, ew2, eb2, ewmu, ebmu, ewlv, eblv,
     dw1, db1, dw2, db2, dw3, db3) = params
    A, L = airfoil_dim, latent_dim
    head_w = _round_up(2 * L, 128)
    a_pad = _round_up(A, 128)
    in_w = _round_up(A + L, 128)

    # slab A: [enc.fc1 (rows 0:A, rest zero) | dec.fc1 (rows 0:L)]
    ra = max(in_w, L)
    wa = jnp.zeros((ra, 384), jnp.float32)
    wa = wa.at[:A, 0:256].set(ew1).at[:L, 256:384].set(dw1)

    # slab B: [fused mu|logvar head (cols 0:2L, rest zero up to head_w) | dec.fc2]
    wb = jnp.zeros((128, head_w + 256), jnp.float32)
    wb = (wb.at[:, 0:L].set(ewmu)
            .at[:, L:2 * L].set(ewlv)
            .at[:, head_w:head_w + 256].set(dw2))

    # slab C: [enc.fc3 | dec.fc3 (cols 0:A, rest zero up to a_pad)]
    wc = jnp.zeros((256, 128 + a_pad), jnp.float32)
    wc = wc.at[:, 0:128].set(ew2).at[:, 128:128 + A].set(dw3)

    # bias slab (kept f32: biases are added to f32 accumulators), zero-padded rows
    bw = max(256, head_w, a_pad)
    bias = jnp.zeros((8, bw), jnp.float32)
    bias = (bias.at[0, 0:256].set(eb1)
                .at[1, 0:128].set(eb2)
                .at[2, 0:L].set(ebmu)
                .at[2, L:2 * L].set(eblv)
                .at[3, 0:128].set(db1)
                .at[4, 0:256].set(db2)
                .at[5, 0:A].set(db3))

    return (wa.astype(jnp.bfloat16), wb.astype(jnp.bfloat16),
            wc.astype(jnp.bfloat16), bias)


def vae_reference(x, eps, params):
    """Pure-JAX reference mirroring the kernel's precision (bf16 MXU inputs, f32 accum)."""
    (ew1, eb1, ew2, eb2, ewmu, ebmu, ewlv, eblv,
     dw1, db1, dw2, db2, dw3, db3) = params
    bf16 = jnp.bfloat16

    def mm(v, w):
        return jnp.dot(v.astype(bf16), w.astype(bf16),
                       preferred_element_type=jnp.float32)

    leaky = lambda v: jnp.maximum(v, 0.2 * v)
    h = leaky(mm(x, ew1) + eb1)
    h = leaky(mm(h, ew2) + eb2)
    mu = mm(h, ewmu) + ebmu
    logvar = mm(h, ewlv) + eblv
    z = mu + eps * jnp.exp(0.5 * logvar)
    d = jnp.maximum(mm(z, dw1) + db1, 0.0)
    d = jnp.maximum(mm(d, dw2) + db2, 0.0)
    recon = jnp.tanh(mm(d, dw3) + db3)
    return recon, mu, logvar


if __name__ == "__main__":
    AIRFOIL_DIM = 64
    LATENT_DIM = 16
    BATCH = 8

    root = jax.random.PRNGKey(0)
    k_params, k_x, k_eps = jax.random.split(root, 3)

    raw_params = init_vae_params(k_params, AIRFOIL_DIM, LATENT_DIM)
    packed = pack_vae_params(raw_params, AIRFOIL_DIM, LATENT_DIM)

    x = jax.random.normal(k_x, (BATCH, AIRFOIL_DIM), jnp.float32)
    # TODO(synk): torch.randn_like draws eps inside the module; here eps is sampled with
    # a deterministic jax.random key in the host wrapper and passed into the kernel.
    eps = jax.random.normal(k_eps, (BATCH, LATENT_DIM), jnp.float32)

    recon, mu, logvar = jax.jit(vae_forward)(x, eps, packed)
    jax.block_until_ready((recon, mu, logvar))

    recon_ref, mu_ref, logvar_ref = vae_reference(x, eps, raw_params)

    assert recon.shape == (BATCH, AIRFOIL_DIM)
    assert mu.shape == (BATCH, LATENT_DIM) and logvar.shape == (BATCH, LATENT_DIM)
    assert jnp.allclose(recon, recon_ref, atol=2e-3, rtol=2e-3), \
        float(jnp.max(jnp.abs(recon - recon_ref)))
    assert jnp.allclose(mu, mu_ref, atol=2e-3, rtol=2e-3), \
        float(jnp.max(jnp.abs(mu - mu_ref)))
    assert jnp.allclose(logvar, logvar_ref, atol=2e-3, rtol=2e-3), \
        float(jnp.max(jnp.abs(logvar - logvar_ref)))

    print("KERNEL_OK")
</pallas_src>

<mosaic_0001>
module attributes {stable_mosaic.version = 11 : i64} {
  func.func @_vae_kernel(%arg0: i32, %arg1: memref<8x128xf32, #tpu.memory_space<vmem>>, %arg2: memref<128x384xbf16, #tpu.memory_space<vmem>>, %arg3: memref<128x384xbf16, #tpu.memory_space<vmem>>, %arg4: memref<256x256xbf16, #tpu.memory_space<vmem>>, %arg5: memref<8x256xf32, #tpu.memory_space<vmem>>, %arg6: memref<8x256xf32, #tpu.memory_space<vmem>>) attributes {dimension_semantics = [#tpu.dimension_semantics<parallel>], iteration_bounds = array<i64: 1>, scalar_prefetch = 0 : i64, scratch_operands = 0 : i64, tpu.core_type = #tpu.core_type<tc>, window_params = [{transform_indices = @transform_0, window_bounds = array<i64: 8, 128>}, {pipeline_mode = #tpu.pipeline_mode<synchronous>, transform_indices = @transform_1, window_bounds = array<i64: 128, 384>}, {pipeline_mode = #tpu.pipeline_mode<synchronous>, transform_indices = @transform_2, window_bounds = array<i64: 128, 384>}, {pipeline_mode = #tpu.pipeline_mode<synchronous>, transform_indices = @transform_3, window_bounds = array<i64: 256, 256>}, {pipeline_mode = #tpu.pipeline_mode<synchronous>, transform_indices = @transform_4, window_bounds = array<i64: 8, 256>}, {transform_indices = @transform_5, window_bounds = array<i64: 8, 256>}]} {
    %c0 = arith.constant 0 : index
    %c0_0 = arith.constant 0 : index
    %0 = vector.load %arg1[%c0, %c0_0] : memref<8x128xf32, #tpu.memory_space<vmem>>, vector<8x128xf32>
    %1 = arith.truncf %0 : vector<8x128xf32> to vector<8x128xbf16>
    %c0_1 = arith.constant 0 : index
    %c0_2 = arith.constant 0 : index
    %2 = vector.load %arg2[%c0_1, %c0_2] : memref<128x384xbf16, #tpu.memory_space<vmem>>, vector<128x256xbf16>
    %cst = arith.constant dense<0.000000e+00> : vector<8x256xf32>
    %3 = tpu.matmul %1, %2, %cst {dimension_numbers = #tpu.dot_dimension_numbers<[1], [0], [0], [1], [0, 0, 1, 1], [], []>} : vector<8x128xbf16>, vector<128x256xbf16>, vector<8x256xf32> -> vector<8x256xf32>
    %c0_3 = arith.constant 0 : index
    %c0_4 = arith.constant 0 : index
    %4 = vector.load %arg5[%c0_3, %c0_4] : memref<8x256xf32, #tpu.memory_space<vmem>>, vector<1x256xf32>
    %5 = vector.broadcast %4 : vector<1x256xf32> to vector<8x256xf32>
    %6 = arith.addf %3, %5 : vector<8x256xf32>
    %cst_5 = arith.constant 2.000000e-01 : f32
    %7 = vector.broadcast %cst_5 : f32 to vector<8x256xf32>
    %8 = arith.mulf %7, %6 : vector<8x256xf32>
    %9 = arith.maximumf %6, %8 : vector<8x256xf32>
    %10 = arith.truncf %9 : vector<8x256xf32> to vector<8x256xbf16>
    %c0_6 = arith.constant 0 : index
    %c0_7 = arith.constant 0 : index
    %11 = vector.load %arg4[%c0_6, %c0_7] : memref<256x256xbf16, #tpu.memory_space<vmem>>, vector<256x128xbf16>
    %cst_8 = arith.constant dense<0.000000e+00> : vector<8x128xf32>
    %12 = tpu.matmul %10, %11, %cst_8 {dimension_numbers = #tpu.dot_dimension_numbers<[1], [0], [0], [1], [0, 0, 1, 1], [], []>} : vector<8x256xbf16>, vector<256x128xbf16>, vector<8x128xf32> -> vector<8x128xf32>
    %c1 = arith.constant 1 : index
    %c0_9 = arith.constant 0 : index
    %13 = vector.load %arg5[%c1, %c0_9] : memref<8x256xf32, #tpu.memory_space<vmem>>, vector<1x128xf32>
    %14 = vector.broadcast %13 : vector<1x128xf32> to vector<8x128xf32>
    %15 = arith.addf %12, %14 : vector<8x128xf32>
    %cst_10 = arith.constant 2.000000e-01 : f32
    %16 = vector.broadcast %cst_10 : f32 to vector<8x128xf32>
    %17 = arith.mulf %16, %15 : vector<8x128xf32>
    %18 = arith.maximumf %15, %17 : vector<8x128xf32>
    %19 = arith.truncf %18 : vector<8x128xf32> to vector<8x128xbf16>
    %c0_11 = arith.constant 0 : index
    %c0_12 = arith.constant 0 : index
    %20 = vector.load %arg3[%c0_11, %c0_12] : memref<128x384xbf16, #tpu.memory_space<vmem>>, vector<128x128xbf16>
    %cst_13 = arith.constant dense<0.000000e+00> : vector<8x128xf32>
    %21 = tpu.matmul %19, %20, %cst_13 {dimension_numbers = #tpu.dot_dimension_numbers<[1], [0], [0], [1], [0, 0, 1, 1], [], []>} : vector<8x128xbf16>, vector<128x128xbf16>, vector<8x128xf32> -> vector<8x128xf32>
    %c2 = arith.constant 2 : index
    %c0_14 = arith.constant 0 : index
    %22 = vector.load %arg5[%c2, %c0_14] : memref<8x256xf32, #tpu.memory_space<vmem>>, vector<1x128xf32>
    %23 = vector.broadcast %22 : vector<1x128xf32> to vector<8x128xf32>
    %24 = arith.addf %21, %23 : vector<8x128xf32>
    %25 = vector.extract_strided_slice %24 {offsets = [0, 0], sizes = [8, 16], strides = [1, 1]} : vector<8x128xf32> to vector<8x16xf32>
    %26 = vector.extract_strided_slice %24 {offsets = [0, 16], sizes = [8, 16], strides = [1, 1]} : vector<8x128xf32> to vector<8x16xf32>
    %27 = vector.extract_strided_slice %0 {offsets = [0, 64], sizes = [8, 16], strides = [1, 1]} : vector<8x128xf32> to vector<8x16xf32>
    %cst_15 = arith.constant 5.000000e-01 : f32
    %28 = vector.broadcast %cst_15 : f32 to vector<8x16xf32>
    %29 = arith.mulf %28, %26 : vector<8x16xf32>
    %30 = math.exp %29 : vector<8x16xf32>
    %31 = arith.mulf %27, %30 : vector<8x16xf32>
    %32 = arith.addf %25, %31 : vector<8x16xf32>
    %33 = arith.truncf %32 : vector<8x16xf32> to vector<8x16xbf16>
    %c0_16 = arith.constant 0 : index
    %c256 = arith.constant 256 : index
    %34 = vector.load %arg2[%c0_16, %c256] : memref<128x384xbf16, #tpu.memory_space<vmem>>, vector<16x128xbf16>
    %cst_17 = arith.constant dense<0.000000e+00> : vector<8x128xf32>
    %35 = tpu.matmul %33, %34, %cst_17 {dimension_numbers = #tpu.dot_dimension_numbers<[1], [0], [0], [1], [0, 0, 1, 1], [], []>} : vector<8x16xbf16>, vector<16x128xbf16>, vector<8x128xf32> -> vector<8x128xf32>
    %c3 = arith.constant 3 : index
    %c0_18 = arith.constant 0 : index
    %36 = vector.load %arg5[%c3, %c0_18] : memref<8x256xf32, #tpu.memory_space<vmem>>, vector<1x128xf32>
    %37 = vector.broadcast %36 : vector<1x128xf32> to vector<8x128xf32>
    %38 = arith.addf %35, %37 : vector<8x128xf32>
    %cst_19 = arith.constant 0.000000e+00 : f32
    %39 = vector.broadcast %cst_19 : f32 to vector<8x128xf32>
    %40 = arith.maximumf %38, %39 : vector<8x128xf32>
    %41 = arith.truncf %40 : vector<8x128xf32> to vector<8x128xbf16>
    %c0_20 = arith.constant 0 : index
    %c128 = arith.constant 128 : index
    %42 = vector.load %arg3[%c0_20, %c128] : memref<128x384xbf16, #tpu.memory_space<vmem>>, vector<128x256xbf16>
    %cst_21 = arith.constant dense<0.000000e+00> : vector<8x256xf32>
    %43 = tpu.matmul %41, %42, %cst_21 {dimension_numbers = #tpu.dot_dimension_numbers<[1], [0], [0], [1], [0, 0, 1, 1], [], []>} : vector<8x128xbf16>, vector<128x256xbf16>, vector<8x256xf32> -> vector<8x256xf32>
    %c4 = arith.constant 4 : index
    %c0_22 = arith.constant 0 : index
    %44 = vector.load %arg5[%c4, %c0_22] : memref<8x256xf32, #tpu.memory_space<vmem>>, vector<1x256xf32>
    %45 = vector.broadcast %44 : vector<1x256xf32> to vector<8x256xf32>
    %46 = arith.addf %43, %45 : vector<8x256xf32>
    %cst_23 = arith.constant 0.000000e+00 : f32
    %47 = vector.broadcast %cst_23 : f32 to vector<8x256xf32>
    %48 = arith.maximumf %46, %47 : vector<8x256xf32>
    %49 = arith.truncf %48 : vector<8x256xf32> to vector<8x256xbf16>
    %c0_24 = arith.constant 0 : index
    %c128_25 = arith.constant 128 : index
    %50 = vector.load %arg4[%c0_24, %c128_25] : memref<256x256xbf16, #tpu.memory_space<vmem>>, vector<256x128xbf16>
    %cst_26 = arith.constant dense<0.000000e+00> : vector<8x128xf32>
    %51 = tpu.matmul %49, %50, %cst_26 {dimension_numbers = #tpu.dot_dimension_numbers<[1], [0], [0], [1], [0, 0, 1, 1], [], []>} : vector<8x256xbf16>, vector<256x128xbf16>, vector<8x128xf32> -> vector<8x128xf32>
    %c5 = arith.constant 5 : index
    %c0_27 = arith.constant 0 : index
    %52 = vector.load %arg5[%c5, %c0_27] : memref<8x256xf32, #tpu.memory_space<vmem>>, vector<1x128xf32>
    %53 = vector.broadcast %52 : vector<1x128xf32> to vector<8x128xf32>
    %54 = arith.addf %51, %53 : vector<8x128xf32>
    %55 = math.tanh %54 : vector<8x128xf32>
    %c0_28 = arith.constant 0 : index
    %c0_29 = arith.constant 0 : index
    %56 = vector.load %arg6[%c0_28, %c0_29] : memref<8x256xf32, #tpu.memory_space<vmem>>, vector<8x128xf32>
    tpu.vector_store %arg6[%c0_28, %c0_29], %55 {strides = array<i32>} : memref<8x256xf32, #tpu.memory_space<vmem>>, vector<8x128xf32>,
    %c0_30 = arith.constant 0 : index
    %c128_31 = arith.constant 128 : index
    %57 = vector.load %arg6[%c0_30, %c128_31] : memref<8x256xf32, #tpu.memory_space<vmem>>, vector<8x128xf32>
    tpu.vector_store %arg6[%c0_30, %c128_31], %24 {strides = array<i32>} : memref<8x256xf32, #tpu.memory_space<vmem>>, vector<8x128xf32>,
    return
  }
  func.func @transform_0(%arg0: i32) -> (i32, i32) {
    %c0_i32 = arith.constant 0 : i32
    %c0_i32_0 = arith.constant 0 : i32
    return %arg0, %c0_i32 : i32, i32
  }
  func.func @transform_1(%arg0: i32) -> (i32, i32) {
    %c0_i32 = arith.constant 0 : i32
    %c0_i32_0 = arith.constant 0 : i32
    %c0_i32_1 = arith.constant 0 : i32
    return %c0_i32, %c0_i32_0 : i32, i32
  }
  func.func @transform_2(%arg0: i32) -> (i32, i32) {
    %c0_i32 = arith.constant 0 : i32
    %c0_i32_0 = arith.constant 0 : i32
    %c0_i32_1 = arith.constant 0 : i32
    return %c0_i32, %c0_i32_0 : i32, i32
  }
  func.func @transform_3(%arg0: i32) -> (i32, i32) {
    %c0_i32 = arith.constant 0 : i32
    %c0_i32_0 = arith.constant 0 : i32
    %c0_i32_1 = arith.constant 0 : i32
    return %c0_i32, %c0_i32_0 : i32, i32
  }
  func.func @transform_4(%arg0: i32) -> (i32, i32) {
    %c0_i32 = arith.constant 0 : i32
    %c0_i32_0 = arith.constant 0 : i32
    %c0_i32_1 = arith.constant 0 : i32
    return %c0_i32, %c0_i32_0 : i32, i32
  }
  func.func @transform_5(%arg0: i32) -> (i32, i32) {
    %c0_i32 = arith.constant 0 : i32
    %c0_i32_0 = arith.constant 0 : i32
    return %arg0, %c0_i32 : i32, i32
  }
}

</mosaic_0001>

<llo_original>
// kernel: vae_forward.1
$region0: #{vae_forward.1}
  #allocation0 [shape = 'u32[]', space=smem, size = 0x4, offset = 0x4, fixed_abs, tag = 'smem constant byte address 0x4 - core index']
  #allocation1 [shape = 'u32[144,128]{1,0:T(1,128)}', space=vmem, size = 0x12000, scoped, tag = 'internal scratch']
  %s0 = inlined_call_operand.vmem [shape: f32[8,128], index: 0, kind: input, shape index: {}]
  %s1 = inlined_call_operand.hbm [shape: bf16[128,384], index: 1, kind: input, shape index: {}]
  %s2 = inlined_call_operand.hbm [shape: bf16[128,384], index: 2, kind: input, shape index: {}]
  %s3 = inlined_call_operand.hbm [shape: bf16[256,256], index: 3, kind: input, shape index: {}]
  %s4 = inlined_call_operand.vmem [shape: f32[8,256], index: 4, kind: input, shape index: {}]
  %s5 = inlined_call_operand.vmem [shape: f32[8,256], index: 5, kind: output, shape index: {}]
  %s6 = sld [smem:[#allocation0]]
  $region42: #{vae_forward.1} parent=0
    _
  %s8 = ssub.s32 1, %s6
  %s9 = scalar_select 0, %s8, %s6
  $region1: #{vae_forward.1} parent=0
    #allocation2 [shape = 'u8[98304]{0}', space=vmem, size = 0x18000, scoped, tag = 'input window, operand 1, single buffered']
    #allocation3 [shape = 's32[1]{0}', space=sflag, size = 0x4, scoped, tag = 'scoped memory for vae_forward.1']
    #allocation4 [shape = 'u8[98304]{0}', space=vmem, size = 0x18000, scoped, tag = 'input window, operand 2, single buffered']
    #allocation5 [shape = 's32[1]{0}', space=sflag, size = 0x4, scoped, tag = 'scoped memory for vae_forward.1']
    #allocation6 [shape = 'u8[131072]{0}', space=vmem, size = 0x20000, scoped, tag = 'input window, operand 3, single buffered']
    %10 = vsyncpa [#allocation3], 0
    %11 = vsyncpa [#allocation5], 0
    // Predicated region
    $region2: #{vae_forward.1} parent=1 // pred_check
      _
    $region3: #{vae_forward.1} parent=1 // pred_check_branch
      %13 = sbr.rel (0) target = $region5
    $region4: #{vae_forward.1} parent=1 // pred_region
      _
    $region5: #{vae_forward.1} parent=1 // pred_fallthru
      _
    // Predicated region
    $region6: #{vae_forward.1} parent=1 // pred_check
      _
    $region7: #{vae_forward.1} parent=1 // pred_check_branch
      %15 = sbr.rel (0) target = $region9
    $region8: #{vae_forward.1} parent=1 // pred_region
      %s17 = ssub.s32 3072, 3072
      %18 = vsyncadd [#allocation3], %s17
      %s19 = sshll.u32 [#allocation2], 4
      %s20 = int_to_ptr.vmem [resolvable:$true] %s19
      %25 = dma.hbm_to_vmem [thread:$0]  %s1, 3072, %s20, [#allocation3], 192, 192, 12
    $region9: #{vae_forward.1} parent=1 // pred_fallthru
      _
    // Predicated region
    $region10: #{vae_forward.1} parent=1 // pred_check
      _
    $region11: #{vae_forward.1} parent=1 // pred_check_branch
      %27 = sbr.rel (0) target = $region13
    $region12: #{vae_forward.1} parent=1 // pred_region
      %s29 = ssub.s32 3072, 3072
      %30 = vsyncadd [#allocation5], %s29
      %s31 = sshll.u32 [#allocation4], 4
      %s32 = int_to_ptr.vmem [resolvable:$true] %s31
      %37 = dma.hbm_to_vmem [thread:$0]  %s2, 3072, %s32, [#allocation5], 192, 192, 12
    $region13: #{vae_forward.1} parent=1 // pred_fallthru
      _
    // Predicated region
    $region14: #{vae_forward.1} parent=1 // pred_check
      _
    $region15: #{vae_forward.1} parent=1 // pred_check_branch
      %39 = sbr.rel (0) target = $region17
    $region16: #{vae_forward.1} parent=1 // pred_region
      %s41 = ssub.s32 4096, 4096
      %42 = vsyncadd [#allocation5], %s41
      %s43 = sshll.u32 [#allocation6], 4
      %s44 = int_to_ptr.vmem [resolvable:$true] %s43
      %49 = dma.hbm_to_vmem [thread:$0]  %s3, 4096, %s44, [#allocation5], 128, 128, 8
    $region17: #{vae_forward.1} parent=1 // pred_fallthru
      _
    // Predicated region
    $region18: #{vae_forward.1} parent=1 // pred_check
      _
    $region19: #{vae_forward.1} parent=1 // pred_check_branch
      %51 = sbr.rel (0) target = $region21
    $region20: #{vae_forward.1} parent=1 // pred_region
      _
    $region21: #{vae_forward.1} parent=1 // pred_fallthru
      _
    // Predicated region
    $region22: #{vae_forward.1} parent=1 // pred_check
      _
    $region23: #{vae_forward.1} parent=1 // pred_check_branch
      %53 = sbr.rel (0) target = $region25
    $region24: #{vae_forward.1} parent=1 // pred_region
      %54 = dma.done [#allocation3], 3072
    $region25: #{vae_forward.1} parent=1 // pred_fallthru
      _
    // Predicated region
    $region26: #{vae_forward.1} parent=1 // pred_check
      _
    $region27: #{vae_forward.1} parent=1 // pred_check_branch
      %56 = sbr.rel (0) target = $region29
    $region28: #{vae_forward.1} parent=1 // pred_region
      %57 = dma.done [#allocation5], 3072
    $region29: #{vae_forward.1} parent=1 // pred_fallthru
      _
    // Predicated region
    $region30: #{vae_forward.1} parent=1 // pred_check
      _
    $region31: #{vae_forward.1} parent=1 // pred_check_branch
      %59 = sbr.rel (0) target = $region33
    $region32: #{vae_forward.1} parent=1 // pred_region
      %60 = dma.done [#allocation5], 4096
    $region33: #{vae_forward.1} parent=1 // pred_fallthru
      _
    %v62 = vld [vmem:[%s0] sm:$0xff]
    %v63 = vpack.c.bf16 %v62, %v62
    %v64 = vld [vmem:[#allocation2] sm:$0xff]
    %v65 = vld [vmem:[#allocation2 + $0xc] sm:$0xff]
    %v66 = vld [vmem:[#allocation2 + $0x18] sm:$0xff]
    %v67 = vld [vmem:[#allocation2 + $0x24] sm:$0xff]
    %v68 = vld [vmem:[#allocation2 + $0x30] sm:$0xff]
    %v69 = vld [vmem:[#allocation2 + $0x3c] sm:$0xff]
    %v70 = vld [vmem:[#allocation2 + $0x48] sm:$0xff]
    %v71 = vld [vmem:[#allocation2 + $0x54] sm:$0xff]
    %v72 = vld [vmem:[#allocation2 + $0x60] sm:$0xff]
    %v73 = vld [vmem:[#allocation2 + $0x6c] sm:$0xff]
    %v74 = vld [vmem:[#allocation2 + $0x78] sm:$0xff]
    %v75 = vld [vmem:[#allocation2 + $0x84] sm:$0xff]
    %v76 = vld [vmem:[#allocation2 + $0x90] sm:$0xff]
    %v77 = vld [vmem:[#allocation2 + $0x9c] sm:$0xff]
    %v78 = vld [vmem:[#allocation2 + $0xa8] sm:$0xff]
    %v79 = vld [vmem:[#allocation2 + $0xb4] sm:$0xff]
    %v80 = vld [vmem:[%s4] ss:$8 sm:$0x3]
    %v82 = vlaneseq
    %v83 = vshrl.u32 %v82, 7
    %v84 = vsub.s32 0, %v83
    %v85 = vrot.slane %v80, %v84
    %v86 = vlaneseq
    %v87 = vshrl.u32 %v86, 7
    %v88 = vsub.s32 1, %v87
    %v89 = vrot.slane %v80, %v88
    %v108 = vunpack.c.l.b16 %v64
    %v109 = vunpack.c.h.b16 %v64
    %v110 = vunpack.c.l.b16 %v65
    %v111 = vunpack.c.h.b16 %v65
    %v112 = vunpack.c.l.b16 %v66
    %v113 = vunpack.c.h.b16 %v66
    %v114 = vunpack.c.l.b16 %v67
    %v115 = vunpack.c.h.b16 %v67
    %v116 = vunpack.c.l.b16 %v68
    %v117 = vunpack.c.h.b16 %v68
    %v118 = vunpack.c.l.b16 %v69
    %v119 = vunpack.c.h.b16 %v69
    %v120 = vunpack.c.l.b16 %v70
    %v121 = vunpack.c.h.b16 %v70
    %v122 = vunpack.c.l.b16 %v71
    %v123 = vunpack.c.h.b16 %v71
    %v124 = vunpack.c.l.b16 %v72
    %v125 = vunpack.c.h.b16 %v72
    %v126 = vunpack.c.l.b16 %v73
    %v127 = vunpack.c.h.b16 %v73
    %v128 = vunpack.c.l.b16 %v74
    %v129 = vunpack.c.h.b16 %v74
    %v130 = vunpack.c.l.b16 %v75
    %v131 = vunpack.c.h.b16 %v75
    %v132 = vunpack.c.l.b16 %v76
    %v133 = vunpack.c.h.b16 %v76
    %v134 = vunpack.c.l.b16 %v77
    %v135 = vunpack.c.h.b16 %v77
    %v136 = vunpack.c.l.b16 %v78
    %v137 = vunpack.c.h.b16 %v78
    %v138 = vunpack.c.l.b16 %v79
    %v139 = vunpack.c.h.b16 %v79
    %v140 = vpack.c.b16 %v110, %v108
    %v141 = vpack.c.b16 %v111, %v109
    %v142 = vpack.c.b16 %v114, %v112
    %v143 = vpack.c.b16 %v115, %v113
    %v144 = vpack.c.b16 %v118, %v116
    %v145 = vpack.c.b16 %v119, %v117
    %v146 = vpack.c.b16 %v122, %v120
    %v147 = vpack.c.b16 %v123, %v121
    %v148 = vpack.c.b16 %v126, %v124
    %v149 = vpack.c.b16 %v127, %v125
    %v150 = vpack.c.b16 %v130, %v128
    %v151 = vpack.c.b16 %v131, %v129
    %v152 = vpack.c.b16 %v134, %v132
    %v153 = vpack.c.b16 %v135, %v133
    %v154 = vpack.c.b16 %v138, %v136
    %v155 = vpack.c.b16 %v139, %v137
    %172 = vmatprep.subr.bf16.mxu0 %v141
    %173 = vmatpush1.bf16.msra.mxu0 %v140
    %174 = vmatprep.subr.bf16.mxu0 %v143
    %175 = vmatpush1.bf16.msra.mxu0 %v142
    %176 = vmatprep.subr.bf16.mxu0 %v145
    %177 = vmatpush1.bf16.msra.mxu0 %v144
    %178 = vmatprep.subr.bf16.mxu0 %v147
    %179 = vmatpush1.bf16.msra.mxu0 %v146
    %180 = vmatprep.subr.bf16.mxu0 %v149
    %181 = vmatpush1.bf16.msra.mxu0 %v148
    %182 = vmatprep.subr.bf16.mxu0 %v151
    %183 = vmatpush1.bf16.msra.mxu0 %v150
    %184 = vmatprep.subr.bf16.mxu0 %v153
    %185 = vmatpush1.bf16.msra.mxu0 %v152
    %186 = vmatprep.subr.bf16.mxu0 %v155
    %187 = vmatpush1.bf16.msra.mxu0 %v154
    %188 = vmatprep.subr.bf16.mxu0 0
    %189 = vmatpush1.bf16.msra.mxu0 0
    %190 = vmatprep.subr.bf16.mxu0 0
    %191 = vmatpush1.bf16.msra.mxu0 0
    %192 = vmatprep.subr.bf16.mxu0 0
    %193 = vmatpush1.bf16.msra.mxu0 0
    %194 = vmatprep.subr.bf16.mxu0 0
    %195 = vmatpush1.bf16.msra.mxu0 0
    %196 = vmatprep.subr.bf16.mxu0 0
    %197 = vmatpush1.bf16.msra.mxu0 0
    %198 = vmatprep.subr.bf16.mxu0 0
    %199 = vmatpush1.bf16.msra.mxu0 0
    %200 = vmatprep.subr.bf16.mxu0 0
    %201 = vmatpush1.bf16.msra.mxu0 0
    %202 = vmatprep.subr.bf16.mxu0 0
    %203 = vmatpush1.bf16.msra.mxu0 0
    %204 = vmatprep.mubr.bf16.mxu0 0
    %205 = vmatmul.mubr.bf16.gmra.mrb[0].mxu0 %v63
    %v206 = vpop.f32.mrb[0].mxu0
    %v207 = vadd.f32 %v85, %v206
    %v208 = vpop.f32.mrb[0].mxu0
    %v209 = vadd.f32 %v89, %v208
    %v210 = vpop.f32.mrb[0].mxu0
    %v211 = vpop.f32.mrb[0].mxu0
    %212 = vdwg.mxu0
    %v213 = vmul.f32 %v207, 0.2
    %v214 = vmul.f32 %v209, 0.2
    %v215 = vmax.f32 %v207, %v213
    %v216 = vmax.f32 %v209, %v214
    %v217 = vpack.c.bf16 %v215, %v215
    %v218 = vpack.c.bf16 %v216, %v216
    %v219 = vld [vmem:[#allocation6] sm:$0xf]
    %v220 = vld [vmem:[#allocation6 + $0x8] sm:$0xf]
    %v221 = vld [vmem:[#allocation6 + $0x10] sm:$0xf]
    %v222 = vld [vmem:[#allocation6 + $0x18] sm:$0xf]
    %v223 = vld [vmem:[#allocation6 + $0x20] sm:$0xf]
    %v224 = vld [vmem:[#allocation6 + $0x28] sm:$0xf]
    %v225 = vld [vmem:[#allocation6 + $0x30] sm:$0xf]
    %v226 = vld [vmem:[#allocation6 + $0x38] sm:$0xf]
    %v227 = vld [vmem:[#allocation6 + $0x40] sm:$0xf]
    %v228 = vld [vmem:[#allocation6 + $0x48] sm:$0xf]
    %v229 = vld [vmem:[#allocation6 + $0x50] sm:$0xf]
    %v230 = vld [vmem:[#allocation6 + $0x58] sm:$0xf]
    %v231 = vld [vmem:[#allocation6 + $0x60] sm:$0xf]
    %v232 = vld [vmem:[#allocation6 + $0x68] sm:$0xf]
    %v233 = vld [vmem:[#allocation6 + $0x70] sm:$0xf]
    %v234 = vld [vmem:[#allocation6 + $0x78] sm:$0xf]
    %v235 = vld [vmem:[#allocation6 + $0x80] sm:$0xf]
    %v236 = vld [vmem:[#allocation6 + $0x88] sm:$0xf]
    %v237 = vld [vmem:[#allocation6 + $0x90] sm:$0xf]
    %v238 = vld [vmem:[#allocation6 + $0x98] sm:$0xf]
    %v239 = vld [vmem:[#allocation6 + $0xa0] sm:$0xf]
    %v240 = vld [vmem:[#allocation6 + $0xa8] sm:$0xf]
    %v241 = vld [vmem:[#allocation6 + $0xb0] sm:$0xf]
    %v242 = vld [vmem:[#allocation6 + $0xb8] sm:$0xf]
    %v243 = vld [vmem:[#allocation6 + $0xc0] sm:$0xf]
    %v244 = vld [vmem:[#allocation6 + $0xc8] sm:$0xf]
    %v245 = vld [vmem:[#allocation6 + $0xd0] sm:$0xf]
    %v246 = vld [vmem:[#allocation6 + $0xd8] sm:$0xf]
    %v247 = vld [vmem:[#allocation6 + $0xe0] sm:$0xf]
    %v248 = vld [vmem:[#allocation6 + $0xe8] sm:$0xf]
    %v249 = vld [vmem:[#allocation6 + $0xf0] sm:$0xf]
    %v250 = vld [vmem:[#allocation6 + $0xf8] sm:$0xf]
    %v251 = vld [vmem:[%s4 + $0x1] ss:$0 sm:$0xff]
    %v284 = vunpack.c.l.b16 %v219
    %v285 = vunpack.c.l.b16 %v220
    %v286 = vunpack.c.l.b16 %v221
    %v287 = vunpack.c.l.b16 %v222
    %v288 = vunpack.c.l.b16 %v223
    %v289 = vunpack.c.l.b16 %v224
    %v290 = vunpack.c.l.b16 %v225
    %v291 = vunpack.c.l.b16 %v226
    %v292 = vunpack.c.l.b16 %v227
    %v293 = vunpack.c.l.b16 %v228
    %v294 = vunpack.c.l.b16 %v229
    %v295 = vunpack.c.l.b16 %v230
    %v296 = vunpack.c.l.b16 %v231
    %v297 = vunpack.c.l.b16 %v232
    %v298 = vunpack.c.l.b16 %v233
    %v299 = vunpack.c.l.b16 %v234
    %v300 = vunpack.c.l.b16 %v235
    %v301 = vunpack.c.l.b16 %v236
    %v302 = vunpack.c.l.b16 %v237
    %v303 = vunpack.c.l.b16 %v238
    %v304 = vunpack.c.l.b16 %v239
    %v305 = vunpack.c.l.b16 %v240
    %v306 = vunpack.c.l.b16 %v241
    %v307 = vunpack.c.l.b16 %v242
    %v308 = vunpack.c.l.b16 %v243
    %v309 = vunpack.c.l.b16 %v244
    %v310 = vunpack.c.l.b16 %v245
    %v311 = vunpack.c.l.b16 %v246
    %v312 = vunpack.c.l.b16 %v247
    %v313 = vunpack.c.l.b16 %v248
    %v314 = vunpack.c.l.b16 %v249
    %v315 = vunpack.c.l.b16 %v250
    %v316 = vpack.c.b16 %v285, %v284
    %v317 = vpack.c.b16 %v287, %v286
    %v318 = vpack.c.b16 %v289, %v288
    %v319 = vpack.c.b16 %v291, %v290
    %v320 = vpack.c.b16 %v293, %v292
    %v321 = vpack.c.b16 %v295, %v294
    %v322 = vpack.c.b16 %v297, %v296
    %v323 = vpack.c.b16 %v299, %v298
    %v324 = vpack.c.b16 %v301, %v300
    %v325 = vpack.c.b16 %v303, %v302
    %v326 = vpack.c.b16 %v305, %v304
    %v327 = vpack.c.b16 %v307, %v306
    %v328 = vpack.c.b16 %v309, %v308
    %v329 = vpack.c.b16 %v311, %v310
    %v330 = vpack.c.b16 %v313, %v312
    %v331 = vpack.c.b16 %v315, %v314
    %348 = vmatprep.subr.bf16.mxu0 0
    %349 = vmatpush1.bf16.msra.mxu0 %v316
    %350 = vmatprep.subr.bf16.mxu0 0
    %351 = vmatpush1.bf16.msra.mxu0 %v317
    %352 = vmatprep.subr.bf16.mxu0 0
    %353 = vmatpush1.bf16.msra.mxu0 %v318
    %354 = vmatprep.subr.bf16.mxu0 0
    %355 = vmatpush1.bf16.msra.mxu0 %v319
    %356 = vmatprep.subr.bf16.mxu0 0
    %357 = vmatpush1.bf16.msra.mxu0 %v320
    %358 = vmatprep.subr.bf16.mxu0 0
    %359 = vmatpush1.bf16.msra.mxu0 %v321
    %360 = vmatprep.subr.bf16.mxu0 0
    %361 = vmatpush1.bf16.msra.mxu0 %v322
    %362 = vmatprep.subr.bf16.mxu0 0
    %363 = vmatpush1.bf16.msra.mxu0 %v323
    %364 = vmatprep.subr.bf16.mxu0 0
    %365 = vmatpush1.bf16.msra.mxu0 %v324
    %366 = vmatprep.subr.bf16.mxu0 0
    %367 = vmatpush1.bf16.msra.mxu0 %v325
    %368 = vmatprep.subr.bf16.mxu0 0
    %369 = vmatpush1.bf16.msra.mxu0 %v326
    %370 = vmatprep.subr.bf16.mxu0 0
    %371 = vmatpush1.bf16.msra.mxu0 %v327
    %372 = vmatprep.subr.bf16.mxu0 0
    %373 = vmatpush1.bf16.msra.mxu0 %v328
    %374 = vmatprep.subr.bf16.mxu0 0
    %375 = vmatpush1.bf16.msra.mxu0 %v329
    %376 = vmatprep.subr.bf16.mxu0 0
    %377 = vmatpush1.bf16.msra.mxu0 %v330
    %378 = vmatprep.subr.bf16.mxu0 0
    %379 = vmatpush1.bf16.msra.mxu0 %v331
    %380 = vmatprep.mubr.bf16.mxu0 %v218
    %381 = vmatmul.mubr.bf16.gmra.mrb[0].mxu0 %v217
    %v382 = vpop.f32.mrb[0].mxu0
    %v383 = vadd.f32 %v251, %v382
    %v384 = vpop.f32.mrb[0].mxu0
    %v385 = vpop.f32.mrb[0].mxu0
    %v386 = vpop.f32.mrb[0].mxu0
    %387 = vdwg.mxu0
    %v388 = vmul.f32 %v383, 0.2
    %v389 = vmax.f32 %v383, %v388
    %v390 = vpack.c.bf16 %v389, %v389
    %v391 = vld [vmem:[#allocation4] sm:$0xf]
    %v392 = vld [vmem:[#allocation4 + $0xc] sm:$0xf]
    %v393 = vld [vmem:[#allocation4 + $0x18] sm:$0xf]
    %v394 = vld [vmem:[#allocation4 + $0x24] sm:$0xf]
    %v395 = vld [vmem:[#allocation4 + $0x30] sm:$0xf]
    %v396 = vld [vmem:[#allocation4 + $0x3c] sm:$0xf]
    %v397 = vld [vmem:[#allocation4 + $0x48] sm:$0xf]
    %v398 = vld [vmem:[#allocation4 + $0x54] sm:$0xf]
    %v399 = vld [vmem:[#allocation4 + $0x60] sm:$0xf]
    %v400 = vld [vmem:[#allocation4 + $0x6c] sm:$0xf]
    %v401 = vld [vmem:[#allocation4 + $0x78] sm:$0xf]
    %v402 = vld [vmem:[#allocation4 + $0x84] sm:$0xf]
    %v403 = vld [vmem:[#allocation4 + $0x90] sm:$0xf]
    %v404 = vld [vmem:[#allocation4 + $0x9c] sm:$0xf]
    %v405 = vld [vmem:[#allocation4 + $0xa8] sm:$0xf]
    %v406 = vld [vmem:[#allocation4 + $0xb4] sm:$0xf]
    %v407 = vld [vmem:[%s4 + $0x2] ss:$0 sm:$0xff]
    %v424 = vunpack.c.l.b16 %v391
    %v425 = vunpack.c.l.b16 %v392
    %v426 = vunpack.c.l.b16 %v393
    %v427 = vunpack.c.l.b16 %v394
    %v428 = vunpack.c.l.b16 %v395
    %v429 = vunpack.c.l.b16 %v396
    %v430 = vunpack.c.l.b16 %v397
    %v431 = vunpack.c.l.b16 %v398
    %v432 = vunpack.c.l.b16 %v399
    %v433 = vunpack.c.l.b16 %v400
    %v434 = vunpack.c.l.b16 %v401
    %v435 = vunpack.c.l.b16 %v402
    %v436 = vunpack.c.l.b16 %v403
    %v437 = vunpack.c.l.b16 %v404
    %v438 = vunpack.c.l.b16 %v405
    %v439 = vunpack.c.l.b16 %v406
    %v440 = vpack.c.b16 %v425, %v424
    %v441 = vpack.c.b16 %v427, %v426
    %v442 = vpack.c.b16 %v429, %v428
    %v443 = vpack.c.b16 %v431, %v430
    %v444 = vpack.c.b16 %v433, %v432
    %v445 = vpack.c.b16 %v435, %v434
    %v446 = vpack.c.b16 %v437, %v436
    %v447 = vpack.c.b16 %v439, %v438
    %456 = vmatprep.subr.bf16.mxu0 0
    %457 = vmatpush1.bf16.msra.mxu0 %v440
    %458 = vmatprep.subr.bf16.mxu0 0
    %459 = vmatpush1.bf16.msra.mxu0 %v441
    %460 = vmatprep.subr.bf16.mxu0 0
    %461 = vmatpush1.bf16.msra.mxu0 %v442
    %462 = vmatprep.subr.bf16.mxu0 0
    %463 = vmatpush1.bf16.msra.mxu0 %v443
    %464 = vmatprep.subr.bf16.mxu0 0
    %465 = vmatpush1.bf16.msra.mxu0 %v444
    %466 = vmatprep.subr.bf16.mxu0 0
    %467 = vmatpush1.bf16.msra.mxu0 %v445
    %468 = vmatprep.subr.bf16.mxu0 0
    %469 = vmatpush1.bf16.msra.mxu0 %v446
    %470 = vmatprep.subr.bf16.mxu0 0
    %471 = vmatpush1.bf16.msra.mxu0 %v447
    %472 = vmatprep.subr.bf16.mxu0 0
    %473 = vmatpush1.bf16.msra.mxu0 0
    %474 = vmatprep.subr.bf16.mxu0 0
    %475 = vmatpush1.bf16.msra.mxu0 0
    %476 = vmatprep.subr.bf16.mxu0 0
    %477 = vmatpush1.bf16.msra.mxu0 0
    %478 = vmatprep.subr.bf16.mxu0 0
    %479 = vmatpush1.bf16.msra.mxu0 0
    %480 = vmatprep.subr.bf16.mxu0 0
    %481 = vmatpush1.bf16.msra.mxu0 0
    %482 = vmatprep.subr.bf16.mxu0 0
    %483 = vmatpush1.bf16.msra.mxu0 0
    %484 = vmatprep.subr.bf16.mxu0 0
    %485 = vmatpush1.bf16.msra.mxu0 0
    %486 = vmatprep.subr.bf16.mxu0 0
    %487 = vmatpush1.bf16.msra.mxu0 0
    %488 = vmatprep.mubr.bf16.mxu0 0
    %489 = vmatmul.mubr.bf16.gmra.mrb[0].mxu0 %v390
    %v490 = vpop.f32.mrb[0].mxu0
    %v491 = vadd.f32 %v407, %v490
    %v492 = vpop.f32.mrb[0].mxu0
    %v493 = vpop.f32.mrb[0].mxu0
    %v494 = vpop.f32.mrb[0].mxu0
    %495 = vdwg.mxu0
    %v496 = vmul.f32 %v491, 0.5
    %v497 = vmul.f32 %v496, 1.442695
    %v498 = vpow.pop %v497
    %500 = vrot.lane.b32.xlu0 %v498, 48
    %v501 = vpop.permute.xlu0 %500
    %v503 = vmul.f32 %v62, %v501
    %505 = vrot.lane.b32.xlu0 %v503, 64
    %v506 = vpop.permute.xlu0 %505
    %v508 = vadd.f32 %v491, %v506
    %v509 = vpack.c.bf16 %v508, %v508
    %v510 = vld [vmem:[#allocation2 + $0x8] sm:$0xf]
    %v511 = vld [vmem:[#allocation2 + $0x14] sm:$0xf]
    %v512 = vld [vmem:[%s4 + $0x3] ss:$0 sm:$0xff]
    %v515 = vunpack.c.l.b16 %v510
    %v516 = vunpack.c.l.b16 %v511
    %v517 = vpack.c.b16 %v516, %v515
    %vm519 = vcmask 130048
    %v521 = vsel %vm519, %v509, 0
    %523 = vmatprep.subr.bf16.mxu0 0
    %524 = vmatpush1.bf16.msra.mxu0 %v517
    %525 = vmatprep.subr.bf16.mxu0 0
    %526 = vmatpush1.bf16.msra.mxu0 0
    %527 = vmatprep.subr.bf16.mxu0 0
    %528 = vmatpush1.bf16.msra.mxu0 0
    %529 = vmatprep.subr.bf16.mxu0 0
    %530 = vmatpush1.bf16.msra.mxu0 0
    %531 = vmatprep.subr.bf16.mxu0 0
    %532 = vmatpush1.bf16.msra.mxu0 0
    %533 = vmatprep.subr.bf16.mxu0 0
    %534 = vmatpush1.bf16.msra.mxu0 0
    %535 = vmatprep.subr.bf16.mxu0 0
    %536 = vmatpush1.bf16.msra.mxu0 0
    %537 = vmatprep.subr.bf16.mxu0 0
    %538 = vmatpush1.bf16.msra.mxu0 0
    %539 = vmatprep.subr.bf16.mxu0 0
    %540 = vmatpush1.bf16.msra.mxu0 0
    %541 = vmatprep.subr.bf16.mxu0 0
    %542 = vmatpush1.bf16.msra.mxu0 0
    %543 = vmatprep.subr.bf16.mxu0 0
    %544 = vmatpush1.bf16.msra.mxu0 0
    %545 = vmatprep.subr.bf16.mxu0 0
    %546 = vmatpush1.bf16.msra.mxu0 0
    %547 = vmatprep.subr.bf16.mxu0 0
    %548 = vmatpush1.bf16.msra.mxu0 0
    %549 = vmatprep.subr.bf16.mxu0 0
    %550 = vmatpush1.bf16.msra.mxu0 0
    %551 = vmatprep.subr.bf16.mxu0 0
    %552 = vmatpush1.bf16.msra.mxu0 0
    %553 = vmatprep.subr.bf16.mxu0 0
    %554 = vmatpush1.bf16.msra.mxu0 0
    %555 = vmatprep.mubr.bf16.mxu0 0
    %556 = vmatmul.mubr.bf16.gmra.mrb[0].mxu0 %v521
    %v557 = vpop.f32.mrb[0].mxu0
    %v558 = vadd.f32 %v512, %v557
    %v559 = vpop.f32.mrb[0].mxu0
    %v560 = vpop.f32.mrb[0].mxu0
    %v561 = vpop.f32.mrb[0].mxu0
    %562 = vdwg.mxu0
    %v563 = vmax.f32 %v558, 0.0
    %v564 = vpack.c.bf16 %v563, %v563
    %v565 = vld [vmem:[#allocation4 + $0x4] sm:$0xff]
    %v566 = vld [vmem:[#allocation4 + $0x10] sm:$0xff]
    %v567 = vld [vmem:[#allocation4 + $0x1c] sm:$0xff]
    %v568 = vld [vmem:[#allocation4 + $0x28] sm:$0xff]
    %v569 = vld [vmem:[#allocation4 + $0x34] sm:$0xff]
    %v570 = vld [vmem:[#allocation4 + $0x40] sm:$0xff]
    %v571 = vld [vmem:[#allocation4 + $0x4c] sm:$0xff]
    %v572 = vld [vmem:[#allocation4 + $0x58] sm:$0xff]
    %v573 = vld [vmem:[#allocation4 + $0x64] sm:$0xff]
    %v574 = vld [vmem:[#allocation4 + $0x70] sm:$0xff]
    %v575 = vld [vmem:[#allocation4 + $0x7c] sm:$0xff]
    %v576 = vld [vmem:[#allocation4 + $0x88] sm:$0xff]
    %v577 = vld [vmem:[#allocation4 + $0x94] sm:$0xff]
    %v578 = vld [vmem:[#allocation4 + $0xa0] sm:$0xff]
    %v579 = vld [vmem:[#allocation4 + $0xac] sm:$0xff]
    %v580 = vld [vmem:[#allocation4 + $0xb8] sm:$0xff]
    %s581 = scalar_lea.vmem %s4, 4
    %v582 = vld [vmem:[%s581] ss:$8 sm:$0x3]
    %v584 = vlaneseq
    %v585 = vshrl.u32 %v584, 7
    %v586 = vsub.s32 0, %v585
    %v587 = vrot.slane %v582, %v586
    %v588 = vlaneseq
    %v589 = vshrl.u32 %v588, 7
    %v590 = vsub.s32 1, %v589
    %v591 = vrot.slane %v582, %v590
    %v610 = vunpack.c.l.b16 %v565
    %v611 = vunpack.c.h.b16 %v565
    %v612 = vunpack.c.l.b16 %v566
    %v613 = vunpack.c.h.b16 %v566
    %v614 = vunpack.c.l.b16 %v567
    %v615 = vunpack.c.h.b16 %v567
    %v616 = vunpack.c.l.b16 %v568
    %v617 = vunpack.c.h.b16 %v568
    %v618 = vunpack.c.l.b16 %v569
    %v619 = vunpack.c.h.b16 %v569
    %v620 = vunpack.c.l.b16 %v570
    %v621 = vunpack.c.h.b16 %v570
    %v622 = vunpack.c.l.b16 %v571
    %v623 = vunpack.c.h.b16 %v571
    %v624 = vunpack.c.l.b16 %v572
    %v625 = vunpack.c.h.b16 %v572
    %v626 = vunpack.c.l.b16 %v573
    %v627 = vunpack.c.h.b16 %v573
    %v628 = vunpack.c.l.b16 %v574
    %v629 = vunpack.c.h.b16 %v574
    %v630 = vunpack.c.l.b16 %v575
    %v631 = vunpack.c.h.b16 %v575
    %v632 = vunpack.c.l.b16 %v576
    %v633 = vunpack.c.h.b16 %v576
    %v634 = vunpack.c.l.b16 %v577
    %v635 = vunpack.c.h.b16 %v577
    %v636 = vunpack.c.l.b16 %v578
    %v637 = vunpack.c.h.b16 %v578
    %v638 = vunpack.c.l.b16 %v579
    %v639 = vunpack.c.h.b16 %v579
    %v640 = vunpack.c.l.b16 %v580
    %v641 = vunpack.c.h.b16 %v580
    %v642 = vpack.c.b16 %v612, %v610
    %v643 = vpack.c.b16 %v613, %v611
    %v644 = vpack.c.b16 %v616, %v614
    %v645 = vpack.c.b16 %v617, %v615
    %v646 = vpack.c.b16 %v620, %v618
    %v647 = vpack.c.b16 %v621, %v619
    %v648 = vpack.c.b16 %v624, %v622
    %v649 = vpack.c.b16 %v625, %v623
    %v650 = vpack.c.b16 %v628, %v626
    %v651 = vpack.c.b16 %v629, %v627
    %v652 = vpack.c.b16 %v632, %v630
    %v653 = vpack.c.b16 %v633, %v631
    %v654 = vpack.c.b16 %v636, %v634
    %v655 = vpack.c.b16 %v637, %v635
    %v656 = vpack.c.b16 %v640, %v638
    %v657 = vpack.c.b16 %v641, %v639
    %674 = vmatprep.subr.bf16.mxu0 %v643
    %675 = vmatpush1.bf16.msra.mxu0 %v642
    %676 = vmatprep.subr.bf16.mxu0 %v645
    %677 = vmatpush1.bf16.msra.mxu0 %v644
    %678 = vmatprep.subr.bf16.mxu0 %v647
    %679 = vmatpush1.bf16.msra.mxu0 %v646
    %680 = vmatprep.subr.bf16.mxu0 %v649
    %681 = vmatpush1.bf16.msra.mxu0 %v648
    %682 = vmatprep.subr.bf16.mxu0 %v651
    %683 = vmatpush1.bf16.msra.mxu0 %v650
    %684 = vmatprep.subr.bf16.mxu0 %v653
    %685 = vmatpush1.bf16.msra.mxu0 %v652
    %686 = vmatprep.subr.bf16.mxu0 %v655
    %687 = vmatpush1.bf16.msra.mxu0 %v654
    %688 = vmatprep.subr.bf16.mxu0 %v657
    %689 = vmatpush1.bf16.msra.mxu0 %v656
    %690 = vmatprep.subr.bf16.mxu0 0
    %691 = vmatpush1.bf16.msra.mxu0 0
    %692 = vmatprep.subr.bf16.mxu0 0
    %693 = vmatpush1.bf16.msra.mxu0 0
    %694 = vmatprep.subr.bf16.mxu0 0
    %695 = vmatpush1.bf16.msra.mxu0 0
    %696 = vmatprep.subr.bf16.mxu0 0
    %697 = vmatpush1.bf16.msra.mxu0 0
    %698 = vmatprep.subr.bf16.mxu0 0
    %699 = vmatpush1.bf16.msra.mxu0 0
    %700 = vmatprep.subr.bf16.mxu0 0
    %701 = vmatpush1.bf16.msra.mxu0 0
    %702 = vmatprep.subr.bf16.mxu0 0
    %703 = vmatpush1.bf16.msra.mxu0 0
    %704 = vmatprep.subr.bf16.mxu0 0
    %705 = vmatpush1.bf16.msra.mxu0 0
    %706 = vmatprep.mubr.bf16.mxu0 0
    %707 = vmatmul.mubr.bf16.gmra.mrb[0].mxu0 %v564
    %v708 = vpop.f32.mrb[0].mxu0
    %v709 = vadd.f32 %v587, %v708
    %v710 = vpop.f32.mrb[0].mxu0
    %v711 = vadd.f32 %v591, %v710
    %v712 = vpop.f32.mrb[0].mxu0
    %v713 = vpop.f32.mrb[0].mxu0
    %714 = vdwg.mxu0
    %v715 = vmax.f32 %v709, 0.0
    %v716 = vmax.f32 %v711, 0.0
    %v717 = vpack.c.bf16 %v715, %v715
    %v718 = vpack.c.bf16 %v716, %v716
    %v719 = vld [vmem:[#allocation6 + $0x4] sm:$0xf]
    %v720 = vld [vmem:[#allocation6 + $0xc] sm:$0xf]
    %v721 = vld [vmem:[#allocation6 + $0x14] sm:$0xf]
    %v722 = vld [vmem:[#allocation6 + $0x1c] sm:$0xf]
    %v723 = vld [vmem:[#allocation6 + $0x24] sm:$0xf]
    %v724 = vld [vmem:[#allocation6 + $0x2c] sm:$0xf]
    %v725 = vld [vmem:[#allocation6 + $0x34] sm:$0xf]
    %v726 = vld [vmem:[#allocation6 + $0x3c] sm:$0xf]
    %v727 = vld [vmem:[#allocation6 + $0x44] sm:$0xf]
    %v728 = vld [vmem:[#allocation6 + $0x4c] sm:$0xf]
    %v729 = vld [vmem:[#allocation6 + $0x54] sm:$0xf]
    %v730 = vld [vmem:[#allocation6 + $0x5c] sm:$0xf]
    %v731 = vld [vmem:[#allocation6 + $0x64] sm:$0xf]
    %v732 = vld [vmem:[#allocation6 + $0x6c] sm:$0xf]
    %v733 = vld [vmem:[#allocation6 + $0x74] sm:$0xf]
    %v734 = vld [vmem:[#allocation6 + $0x7c] sm:$0xf]
    %v735 = vld [vmem:[#allocation6 + $0x84] sm:$0xf]
    %v736 = vld [vmem:[#allocation6 + $0x8c] sm:$0xf]
    %v737 = vld [vmem:[#allocation6 + $0x94] sm:$0xf]
    %v738 = vld [vmem:[#allocation6 + $0x9c] sm:$0xf]
    %v739 = vld [vmem:[#allocation6 + $0xa4] sm:$0xf]
    %v740 = vld [vmem:[#allocation6 + $0xac] sm:$0xf]
    %v741 = vld [vmem:[#allocation6 + $0xb4] sm:$0xf]
    %v742 = vld [vmem:[#allocation6 + $0xbc] sm:$0xf]
    %v743 = vld [vmem:[#allocation6 + $0xc4] sm:$0xf]
    %v744 = vld [vmem:[#allocation6 + $0xcc] sm:$0xf]
    %v745 = vld [vmem:[#allocation6 + $0xd4] sm:$0xf]
    %v746 = vld [vmem:[#allocation6 + $0xdc] sm:$0xf]
    %v747 = vld [vmem:[#allocation6 + $0xe4] sm:$0xf]
    %v748 = vld [vmem:[#allocation6 + $0xec] sm:$0xf]
    %v749 = vld [vmem:[#allocation6 + $0xf4] sm:$0xf]
    %v750 = vld [vmem:[#allocation6 + $0xfc] sm:$0xf]
    %v751 = vld [vmem:[%s4 + $0x5] ss:$0 sm:$0xff]
    %v784 = vunpack.c.l.b16 %v719
    %v785 = vunpack.c.l.b16 %v720
    %v786 = vunpack.c.l.b16 %v721
    %v787 = vunpack.c.l.b16 %v722
    %v788 = vunpack.c.l.b16 %v723
    %v789 = vunpack.c.l.b16 %v724
    %v790 = vunpack.c.l.b16 %v725
    %v791 = vunpack.c.l.b16 %v726
    %v792 = vunpack.c.l.b16 %v727
    %v793 = vunpack.c.l.b16 %v728
    %v794 = vunpack.c.l.b16 %v729
    %v795 = vunpack.c.l.b16 %v730
    %v796 = vunpack.c.l.b16 %v731
    %v797 = vunpack.c.l.b16 %v732
    %v798 = vunpack.c.l.b16 %v733
    %v799 = vunpack.c.l.b16 %v734
    %v800 = vunpack.c.l.b16 %v735
    %v801 = vunpack.c.l.b16 %v736
    %v802 = vunpack.c.l.b16 %v737
    %v803 = vunpack.c.l.b16 %v738
    %v804 = vunpack.c.l.b16 %v739
    %v805 = vunpack.c.l.b16 %v740
    %v806 = vunpack.c.l.b16 %v741
    %v807 = vunpack.c.l.b16 %v742
    %v808 = vunpack.c.l.b16 %v743
    %v809 = vunpack.c.l.b16 %v744
    %v810 = vunpack.c.l.b16 %v745
    %v811 = vunpack.c.l.b16 %v746
    %v812 = vunpack.c.l.b16 %v747
    %v813 = vunpack.c.l.b16 %v748
    %v814 = vunpack.c.l.b16 %v749
    %v815 = vunpack.c.l.b16 %v750
    %v816 = vpack.c.b16 %v785, %v784
    %v817 = vpack.c.b16 %v787, %v786
    %v818 = vpack.c.b16 %v789, %v788
    %v819 = vpack.c.b16 %v791, %v790
    %v820 = vpack.c.b16 %v793, %v792
    %v821 = vpack.c.b16 %v795, %v794
    %v822 = vpack.c.b16 %v797, %v796
    %v823 = vpack.c.b16 %v799, %v798
    %v824 = vpack.c.b16 %v801, %v800
    %v825 = vpack.c.b16 %v803, %v802
    %v826 = vpack.c.b16 %v805, %v804
    %v827 = vpack.c.b16 %v807, %v806
    %v828 = vpack.c.b16 %v809, %v808
    %v829 = vpack.c.b16 %v811, %v810
    %v830 = vpack.c.b16 %v813, %v812
    %v831 = vpack.c.b16 %v815, %v814
    %848 = vmatprep.subr.bf16.mxu0 0
    %849 = vmatpush1.bf16.msra.mxu0 %v816
    %850 = vmatprep.subr.bf16.mxu0 0
    %851 = vmatpush1.bf16.msra.mxu0 %v817
    %852 = vmatprep.subr.bf16.mxu0 0
    %853 = vmatpush1.bf16.msra.mxu0 %v818
    %854 = vmatprep.subr.bf16.mxu0 0
    %855 = vmatpush1.bf16.msra.mxu0 %v819
    %856 = vmatprep.subr.bf16.mxu0 0
    %857 = vmatpush1.bf16.msra.mxu0 %v820
    %858 = vmatprep.subr.bf16.mxu0 0
    %859 = vmatpush1.bf16.msra.mxu0 %v821
    %860 = vmatprep.subr.bf16.mxu0 0
    %861 = vmatpush1.bf16.msra.mxu0 %v822
    %862 = vmatprep.subr.bf16.mxu0 0
    %863 = vmatpush1.bf16.msra.mxu0 %v823
    %864 = vmatprep.subr.bf16.mxu0 0
    %865 = vmatpush1.bf16.msra.mxu0 %v824
    %866 = vmatprep.subr.bf16.mxu0 0
    %867 = vmatpush1.bf16.msra.mxu0 %v825
    %868 = vmatprep.subr.bf16.mxu0 0
    %869 = vmatpush1.bf16.msra.mxu0 %v826
    %870 = vmatprep.subr.bf16.mxu0 0
    %871 = vmatpush1.bf16.msra.mxu0 %v827
    %872 = vmatprep.subr.bf16.mxu0 0
    %873 = vmatpush1.bf16.msra.mxu0 %v828
    %874 = vmatprep.subr.bf16.mxu0 0
    %875 = vmatpush1.bf16.msra.mxu0 %v829
    %876 = vmatprep.subr.bf16.mxu0 0
    %877 = vmatpush1.bf16.msra.mxu0 %v830
    %878 = vmatprep.subr.bf16.mxu0 0
    %879 = vmatpush1.bf16.msra.mxu0 %v831
    %880 = vmatprep.mubr.bf16.mxu0 %v718
    %881 = vmatmul.mubr.bf16.gmra.mrb[0].mxu0 %v717
    %v882 = vpop.f32.mrb[0].mxu0
    %v883 = vadd.f32 %v751, %v882
    %v884 = vpop.f32.mrb[0].mxu0
    %v885 = vpop.f32.mrb[0].mxu0
    %v886 = vpop.f32.mrb[0].mxu0
    %887 = vdwg.mxu0
    %v888 = vtanh.pop %v883
    %889 = vst [vmem:[%s5] sm:$0xff] %v888
    %890 = vst [vmem:[%s5 + $0x8] sm:$0xff] %v491
    // Predicated region
    $region34: #{vae_forward.1} parent=1 // pred_check
      _
    $region35: #{vae_forward.1} parent=1 // pred_check_branch
      %892 = sbr.rel (0) target = $region37
    $region36: #{vae_forward.1} parent=1 // pred_region
      _
    $region37: #{vae_forward.1} parent=1 // pred_fallthru
      _
    // Predicated region
    $region38: #{vae_forward.1} parent=1 // pred_check
      _
    $region39: #{vae_forward.1} parent=1 // pred_check_branch
      %894 = sbr.rel (0) target = $region41
    $region40: #{vae_forward.1} parent=1 // pred_region
      _
    $region41: #{vae_forward.1} parent=1 // pred_fallthru
      _
    %895 = vsyncpa [#allocation3], 1
    %896 = vsyncpa [#allocation5], 1

</llo_original>
